<compile_context>
chip_gen: v5e
topology: v5e:2x2
jax: 0.10.0
libtpu: 0.0.40
codegen_flags: <defaults>
</compile_context>

<pallas_src>
import functools

import jax
import jax.numpy as jnp
from jax.experimental import pallas as pl
from jax.experimental.pallas import tpu as pltpu

BN_EPS = 1e-5
LANE = 128


def _round_up(x, m):
    return (x + m - 1) // m * m


def _vmem_limit_bytes():
    """Chip-aware VMEM budget: ~3/4 of physical VMEM, capped at 96 MiB.
    v5e/v6e (128 MiB) -> 96 MiB; v7x (64 MiB per TensorCore) -> 48 MiB."""
    phys = 64 * 1024 * 1024  # conservative default = v7x per-TC VMEM
    try:
        phys = int(getattr(pltpu.get_tpu_info(), "vmem_capacity_bytes", phys))
    except Exception:
        pass
    return min(phys * 3 // 4, 96 * 1024 * 1024)


def _pad_rows(n):
    """Pad node count to 128 for small graphs (ghost rows <= 127); to 512 for large graphs
    so >=512 row/K tiles (~85%+ of HBM roofline) divide evenly (<7% waste at n >= 8k)."""
    return _round_up(n, 128 if n <= 2048 else 512)


def _choose_tiles(n_pad, c_p, adj_itemsize, budget):
    """Pick (row_tile, k_tile) dividing n_pad.  With the K grid axis the VMEM footprint is
    independent of N, so the budget only binds for very wide channel dims."""
    cands = [t for t in (1024, 512, 256, 128) if n_pad % t == 0] or [128]
    tk = min(cands[0], 512)
    for tm in cands:
        need = (2 * tm * tk * adj_itemsize      # streamed adj tile (double-buffered)
                + 2 * tk * c_p * 2              # streamed x / XW tile, bf16 (double-buffered)
                + tm * c_p * 4                  # f32 accumulator scratch
                + 2 * tm * c_p * 4              # output tile (double-buffered, f32 worst case)
                + 2 * c_p * c_p * 2             # resident folded W (aggregate-first worst case)
                + 2 * c_p * 4)                  # resident shift
        if need <= budget:
            return tm, tk
    return cands[-1], tk


# ---------------------------------------------------------------------------
# Kernels
# ---------------------------------------------------------------------------

def _adj_matmul_kernel(adj_ref, z_ref, shift_ref, o_ref, acc_ref, *, apply_relu):
    """Row/K tile of  h = A_hat @ Z + shift [, ReLU]  where Z = x @ W_eff was hoisted."""
    k = pl.program_id(1)

    @pl.when(k == 0)
    def _init():
        acc_ref[...] = jnp.zeros_like(acc_ref)

    a = adj_ref[...].astype(jnp.bfloat16)  # int8 -> bf16 dequant (scale folded into W_eff)
    acc_ref[...] += jnp.dot(a, z_ref[...], preferred_element_type=jnp.float32)

    @pl.when(k == pl.num_programs(1) - 1)
    def _finalize():
        h = acc_ref[...] + shift_ref[...]
        if apply_relu:
            h = jnp.maximum(h, 0.0)
        o_ref[...] = h.astype(o_ref.dtype)


def _adj_matmul_then_w_kernel(adj_ref, x_ref, w_ref, shift_ref, o_ref, acc_ref, *, apply_relu):
    """Row/K tile of  h = (A_hat @ x) @ W_eff + shift [, ReLU]  (aggregate-first; used when
    the padded input width is narrower than the padded output width)."""
    k = pl.program_id(1)

    @pl.when(k == 0)
    def _init():
        acc_ref[...] = jnp.zeros_like(acc_ref)

    a = adj_ref[...].astype(jnp.bfloat16)
    acc_ref[...] += jnp.dot(a, x_ref[...], preferred_element_type=jnp.float32)

    @pl.when(k == pl.num_programs(1) - 1)
    def _finalize():
        h = jnp.dot(acc_ref[...].astype(w_ref.dtype), w_ref[...],
                    preferred_element_type=jnp.float32) + shift_ref[...]
        if apply_relu:
            h = jnp.maximum(h, 0.0)
        o_ref[...] = h.astype(o_ref.dtype)


def gcn_layer(adj_q, z, w_p, shift_p, *, transform_first, apply_relu, out_dtype,
              row_tile, k_tile, vmem_limit):
    n_pad = adj_q.shape[0]
    c_z = z.shape[1]
    c_out_p = shift_p.shape[1]
    m_steps = n_pad // row_tile
    k_steps = n_pad // k_tile

    if transform_first:
        kernel = functools.partial(_adj_matmul_kernel, apply_relu=apply_relu)
        in_specs = [
            pl.BlockSpec((row_tile, k_tile), lambda i, k: (i, k)),   # adj tile (streamed)
            pl.BlockSpec((k_tile, c_z), lambda i, k: (k, 0)),        # XW (streamed along K)
            pl.BlockSpec((1, c_out_p), lambda i, k: (0, 0)),         # folded shift (resident)
        ]
        operands = (adj_q, z, shift_p)
        acc_cols = c_out_p
        flops = 2 * n_pad * n_pad * c_z
        w_bytes = 0
    else:
        kernel = functools.partial(_adj_matmul_then_w_kernel, apply_relu=apply_relu)
        in_specs = [
            pl.BlockSpec((row_tile, k_tile), lambda i, k: (i, k)),   # adj tile (streamed)
            pl.BlockSpec((k_tile, c_z), lambda i, k: (k, 0)),        # x (streamed along K)
            pl.BlockSpec((c_z, c_out_p), lambda i, k: (0, 0)),       # folded W (resident)
            pl.BlockSpec((1, c_out_p), lambda i, k: (0, 0)),         # folded shift (resident)
        ]
        operands = (adj_q, z, w_p, shift_p)
        acc_cols = c_z
        flops = 2 * n_pad * n_pad * c_z + 2 * n_pad * c_z * c_out_p
        w_bytes = w_p.size * w_p.dtype.itemsize

    bytes_accessed = (adj_q.size * adj_q.dtype.itemsize
                      + m_steps * z.size * z.dtype.itemsize      # z re-read once per row tile
                      + w_bytes
                      + shift_p.size * shift_p.dtype.itemsize
                      + n_pad * c_out_p * jnp.dtype(out_dtype).itemsize)

    return pl.pallas_call(
        kernel,
        out_shape=jax.ShapeDtypeStruct((n_pad, c_out_p), out_dtype),
        grid=(m_steps, k_steps),
        in_specs=in_specs,
        out_specs=pl.BlockSpec((row_tile, c_out_p), lambda i, k: (i, 0)),
        scratch_shapes=[pltpu.VMEM((row_tile, acc_cols), jnp.float32)],
        compiler_params=pltpu.CompilerParams(
            dimension_semantics=("parallel", "arbitrary"),
            vmem_limit_bytes=int(vmem_limit)),
        cost_estimate=pl.CostEstimate(flops=int(flops), transcendentals=0,
                                      bytes_accessed=int(bytes_accessed)),
    )(*operands)


# ---------------------------------------------------------------------------
# Preparation (one-time per graph / per weights) and jit-able apply
# ---------------------------------------------------------------------------

def _fold_and_pad(w, b, gamma=None, beta=None, mean=None, var=None, adj_scale=1.0):
    """Fold bias + BatchNorm(eval) + adj dequant scale into (W_eff, shift);
    zero-pad channels to multiples of 128; cast W to bf16, shift stays f32."""
    c_in, c_out = w.shape
    if gamma is not None:
        scale = gamma * jax.lax.rsqrt(var + BN_EPS)
        w_eff = w * scale[None, :]
        shift = beta + (b - mean) * scale
    else:
        w_eff = w
        shift = b
    # (scale_adj * A_q) @ x @ W  ==  A_q @ x @ (scale_adj * W)  -> fold scale into W, not shift.
    w_eff = w_eff * adj_scale
    c_in_p = _round_up(c_in, LANE)
    c_out_p = _round_up(c_out, LANE)
    w_p = jnp.pad(w_eff, ((0, c_in_p - c_in), (0, c_out_p - c_out))).astype(jnp.bfloat16)
    s_p = jnp.pad(shift, ((0, c_out_p - c_out),)).reshape(1, c_out_p).astype(jnp.float32)
    return w_p, s_p


def gcn_prepare(adj, params, *, quantize_adj=True):
    """One-time preprocessing (hoisted out of the inference path): pad + int8-quantize adj,
    fold bias/BN/adj-scale into per-layer (W_eff, shift), pad channel dims to 128."""
    n = adj.shape[0]
    n_pad = _pad_rows(n)
    adj_p = jnp.pad(adj.astype(jnp.float32), ((0, n_pad - n), (0, n_pad - n)))

    if quantize_adj:
        # adj is the dominant HBM stream (re-read every layer); int8 halves it vs bf16.
        # The kernel dequantizes with a cheap int8->bf16 cast so the MXU always sees bf16.
        adj_scale = jnp.maximum(jnp.max(jnp.abs(adj_p)), 1e-30) / 127.0
        adj_q = jnp.round(adj_p / adj_scale).astype(jnp.int8)
    else:
        adj_scale = jnp.float32(1.0)
        adj_q = adj_p.astype(jnp.bfloat16)

    layers = []
    for li, layer in enumerate(params):
        is_last = li == len(params) - 1
        if is_last:
            w_p, s_p = _fold_and_pad(layer["w"], layer["b"], adj_scale=adj_scale)
        else:
            w_p, s_p = _fold_and_pad(layer["w"], layer["b"], layer["gamma"], layer["beta"],
                                     layer["mean"], layer["var"], adj_scale=adj_scale)
        c_in_p, c_out_p = w_p.shape
        layers.append(dict(
            w=w_p, shift=s_p,
            # Decide on the PADDED widths the MXU actually sees; ties go to transform-first
            # (hoisted x@W) which also removes the resident W from the kernel.
            transform_first=c_out_p <= c_in_p,
            apply_relu=not is_last))

    return dict(adj=adj_q, n=n, n_pad=n_pad, layers=layers,
                in_c=params[0]["w"].shape[0], out_c=params[-1]["w"].shape[1])


def gcn_apply(x, prepared, *, tiles=None, vmem_limit=None):
    """Per-inference path (jit-able; close over `prepared` so its config stays static)."""
    n, in_c = x.shape
    assert n == prepared["n"] and in_c == prepared["in_c"]
    n_pad = prepared["n_pad"]
    adj_q = prepared["adj"]
    layers = prepared["layers"]

    if vmem_limit is None:
        vmem_limit = _vmem_limit_bytes()
    if tiles is None:
        c_max_p = max(max(l["w"].shape) for l in layers)
        row_tile, k_tile = _choose_tiles(n_pad, c_max_p, adj_q.dtype.itemsize,
                                         int(vmem_limit * 0.9))
    else:
        row_tile, k_tile = tiles
        assert n_pad % row_tile == 0 and n_pad % k_tile == 0, (n_pad, tiles)

    in_c_p = layers[0]["w"].shape[0]
    h = jnp.pad(x, ((0, n_pad - n), (0, in_c_p - in_c))).astype(jnp.bfloat16)

    # Invariant: rows n..n_pad-1 of h hold relu(shift) after a hidden layer (NOT zero).
    # Safe because the padded columns of adj are exactly zero, so ghost rows never
    # propagate into valid rows.  Do not read h's ghost rows (e.g. residuals) directly.
    for layer in layers:
        w_p, s_p = layer["w"], layer["shift"]
        apply_relu = layer["apply_relu"]
        out_dtype = jnp.bfloat16 if apply_relu else jnp.float32   # last layer in f32
        if layer["transform_first"]:
            # Hoisted x @ W_eff: one small XLA bf16 matmul (N x c_in x c_out); the kernel
            # then only streams adj against the (n_pad, c_out_p) XW operand.
            z = jnp.dot(h, w_p, preferred_element_type=jnp.float32).astype(jnp.bfloat16)
            h = gcn_layer(adj_q, z, None, s_p, transform_first=True,
                          apply_relu=apply_relu, out_dtype=out_dtype,
                          row_tile=row_tile, k_tile=k_tile, vmem_limit=vmem_limit)
        else:
            h = gcn_layer(adj_q, h, w_p, s_p, transform_first=False,
                          apply_relu=apply_relu, out_dtype=out_dtype,
                          row_tile=row_tile, k_tile=k_tile, vmem_limit=vmem_limit)
        # F.dropout(training=False) == identity
    return h[:n, :prepared["out_c"]]


def gcn_forward(x, adj, params, *, quantize_adj=True, tiles=None):
    """Convenience: prepare + apply.  For repeated inference, call gcn_prepare once and
    jit a closure over gcn_apply (avoids re-padding/quantizing adj on every call)."""
    return gcn_apply(x, gcn_prepare(adj, params, quantize_adj=quantize_adj), tiles=tiles)


# ---------------------------------------------------------------------------
# Reference + synthetic data
# ---------------------------------------------------------------------------

def gcn_reference(x, adj, params):
    h = x
    for layer in params[:-1]:
        h = adj @ (h @ layer["w"]) + layer["b"]
        inv = 1.0 / jnp.sqrt(layer["var"] + BN_EPS)
        h = (h - layer["mean"]) * inv * layer["gamma"] + layer["beta"]
        h = jnp.maximum(h, 0.0)
    last = params[-1]
    return adj @ (h @ last["w"]) + last["b"]


def make_normalized_adj(key, n, avg_degree=8):
    p = avg_degree / n
    a = (jax.random.uniform(key, (n, n)) < p).astype(jnp.float32)
    a = jnp.maximum(a, a.T)
    a = a + jnp.eye(n, dtype=jnp.float32)      # self loops
    deg = jnp.sum(a, axis=1)
    d_inv_sqrt = 1.0 / jnp.sqrt(deg)
    return a * d_inv_sqrt[:, None] * d_inv_sqrt[None, :]


def init_params(key, in_channels, hidden_channels, out_channels, num_layers):
    dims = [in_channels] + [hidden_channels] * (num_layers - 1) + [out_channels]
    params = []
    for i in range(num_layers):
        key, kw, kg, kb, km, kv = jax.random.split(key, 6)
        c_in, c_out = dims[i], dims[i + 1]
        layer = {
            "w": jax.random.normal(kw, (c_in, c_out), jnp.float32) / jnp.sqrt(c_in),
            "b": jnp.zeros((c_out,), jnp.float32),
        }
        if i < num_layers - 1:
            layer["gamma"] = 1.0 + 0.1 * jax.random.normal(kg, (c_out,), jnp.float32)
            layer["beta"] = 0.1 * jax.random.normal(kb, (c_out,), jnp.float32)
            layer["mean"] = 0.1 * jax.random.normal(km, (c_out,), jnp.float32)
            layer["var"] = 0.5 + jnp.abs(jax.random.normal(kv, (c_out,), jnp.float32))
        params.append(layer)
    return params


if __name__ == "__main__":
    def run_case(n, in_c, hid_c, out_c, num_layers, key, tiles=None):
        k_adj, k_x, k_p = jax.random.split(key, 3)
        adj = make_normalized_adj(k_adj, n)
        x = jax.random.normal(k_x, (n, in_c), jnp.float32)
        params = init_params(k_p, in_c, hid_c, out_c, num_layers)

        prepared = gcn_prepare(adj, params)                       # one-time per graph/weights
        fwd = jax.jit(lambda xx: gcn_apply(xx, prepared, tiles=tiles))
        out = fwd(x)
        jax.block_until_ready(out)

        assert out.shape == (n, out_c), out.shape
        assert out.dtype == jnp.float32
        assert bool(jnp.all(jnp.isfinite(out)))

        # Validate the int8-adj / bf16 / folded-BN kernel path against the f32 reference
        # (loose tolerance covering int8 adj quantization + bf16 compute over all layers).
        ref = gcn_reference(x, adj, params)
        err = float(jnp.max(jnp.abs(out - ref)))
        ref_scale = float(jnp.max(jnp.abs(ref))) + 1e-6
        assert err <= 0.07 * ref_scale + 0.07, (err, ref_scale)
        return out

    key = jax.random.PRNGKey(0)
    key, k1, k2 = jax.random.split(key, 3)

    # Case 1 (original test shapes): N=128, in=32, hidden=64, out=16, 3 layers.
    # All padded widths are 128 -> hoisted-XW (transform-first) kernel path.
    run_case(128, 32, 64, 16, 3, k1)

    # Case 2: wide hidden layer (200 -> padded 256) exercises the aggregate-first kernel
    # (layer 0) and the transform-first kernel (layer 1), with forced 128x128 tiles so the
    # M/K grid is 3x3 and the pl.when accumulator init/finalize logic runs multi-step.
    run_case(384, 24, 200, 8, 2, k2, tiles=(128, 128))

    print("KERNEL_OK")
</pallas_src>

<mosaic_0001>
module attributes {stable_mosaic.version = 11 : i64} {
  func.func @_adj_matmul_kernel(%arg0: i32, %arg1: i32, %arg2: memref<128x128xi8, #tpu.memory_space<vmem>>, %arg3: memref<128x128xbf16, #tpu.memory_space<vmem>>, %arg4: memref<1x128xf32, #tpu.memory_space<vmem>>, %arg5: memref<128x128xbf16, #tpu.memory_space<vmem>>, %arg6: memref<128x128xf32, #tpu.memory_space<vmem>>) attributes {dimension_semantics = [#tpu.dimension_semantics<parallel>, #tpu.dimension_semantics<arbitrary>], iteration_bounds = array<i64: 1, 1>, scalar_prefetch = 0 : i64, scratch_operands = 1 : i64, tpu.core_type = #tpu.core_type<tc>, window_params = [{transform_indices = @transform_0, window_bounds = array<i64: 128, 128>}, {transform_indices = @transform_1, window_bounds = array<i64: 128, 128>}, {pipeline_mode = #tpu.pipeline_mode<synchronous>, transform_indices = @transform_2, window_bounds = array<i64: 1, 128>}, {transform_indices = @transform_3, window_bounds = array<i64: 128, 128>}]} {
    %c0_i32 = arith.constant 0 : i32
    %0 = arith.cmpi eq, %arg1, %c0_i32 : i32
    %1 = arith.extui %0 : i1 to i32
    %c0_i32_0 = arith.constant 0 : i32
    %2 = arith.cmpi ne, %1, %c0_i32_0 : i32
    scf.if %2 {
      %cst_10 = arith.constant 0.000000e+00 : f32
      %13 = vector.broadcast %cst_10 : f32 to vector<128x128xf32>
      %c0_11 = arith.constant 0 : index
      %c0_12 = arith.constant 0 : index
      %14 = vector.load %arg6[%c0_11, %c0_12] : memref<128x128xf32, #tpu.memory_space<vmem>>, vector<128x128xf32>
      tpu.vector_store %arg6[%c0_11, %c0_12], %13 {strides = array<i32>} : memref<128x128xf32, #tpu.memory_space<vmem>>, vector<128x128xf32>,
    } else {
    }
    %c0 = arith.constant 0 : index
    %c0_1 = arith.constant 0 : index
    %3 = vector.load %arg2[%c0, %c0_1] : memref<128x128xi8, #tpu.memory_space<vmem>>, vector<128x128xi8>
    %4 = arith.sitofp %3 : vector<128x128xi8> to vector<128x128xbf16>
    %c0_2 = arith.constant 0 : index
    %c0_3 = arith.constant 0 : index
    %5 = vector.load %arg6[%c0_2, %c0_3] : memref<128x128xf32, #tpu.memory_space<vmem>>, vector<128x128xf32>
    %c0_4 = arith.constant 0 : index
    %c0_5 = arith.constant 0 : index
    %6 = vector.load %arg3[%c0_4, %c0_5] : memref<128x128xbf16, #tpu.memory_space<vmem>>, vector<128x128xbf16>
    %cst = arith.constant dense<0.000000e+00> : vector<128x128xf32>
    %7 = tpu.matmul %4, %6, %cst {dimension_numbers = #tpu.dot_dimension_numbers<[1], [0], [0], [1], [0, 0, 1, 1], [], []>} : vector<128x128xbf16>, vector<128x128xbf16>, vector<128x128xf32> -> vector<128x128xf32>
    %8 = arith.addf %5, %7 : vector<128x128xf32>
    %c0_6 = arith.constant 0 : index
    %c0_7 = arith.constant 0 : index
    %9 = vector.load %arg6[%c0_6, %c0_7] : memref<128x128xf32, #tpu.memory_space<vmem>>, vector<128x128xf32>
    tpu.vector_store %arg6[%c0_6, %c0_7], %8 {strides = array<i32>} : memref<128x128xf32, #tpu.memory_space<vmem>>, vector<128x128xf32>,
    %c0_i32_8 = arith.constant 0 : i32
    %10 = arith.cmpi eq, %arg1, %c0_i32_8 : i32
    %11 = arith.extui %10 : i1 to i32
    %c0_i32_9 = arith.constant 0 : i32
    %12 = arith.cmpi ne, %11, %c0_i32_9 : i32
    scf.if %12 {
      %c0_10 = arith.constant 0 : index
      %c0_11 = arith.constant 0 : index
      %13 = vector.load %arg6[%c0_10, %c0_11] : memref<128x128xf32, #tpu.memory_space<vmem>>, vector<128x128xf32>
      %c0_12 = arith.constant 0 : index
      %c0_13 = arith.constant 0 : index
      %14 = vector.load %arg4[%c0_12, %c0_13] : memref<1x128xf32, #tpu.memory_space<vmem>>, vector<1x128xf32>
      %15 = vector.broadcast %14 : vector<1x128xf32> to vector<128x128xf32>
      %16 = arith.addf %13, %15 : vector<128x128xf32>
      %cst_14 = arith.constant 0.000000e+00 : f32
      %17 = vector.broadcast %cst_14 : f32 to vector<128x128xf32>
      %18 = arith.maximumf %16, %17 : vector<128x128xf32>
      %19 = arith.truncf %18 : vector<128x128xf32> to vector<128x128xbf16>
      %c0_15 = arith.constant 0 : index
      %c0_16 = arith.constant 0 : index
      %20 = vector.load %arg5[%c0_15, %c0_16] : memref<128x128xbf16, #tpu.memory_space<vmem>>, vector<128x128xbf16>
      tpu.vector_store %arg5[%c0_15, %c0_16], %19 {strides = array<i32>} : memref<128x128xbf16, #tpu.memory_space<vmem>>, vector<128x128xbf16>,
    } else {
    }
    return
  }
  func.func @transform_0(%arg0: i32, %arg1: i32) -> (i32, i32) {
    %c0_i32 = arith.constant 0 : i32
    return %arg0, %arg1 : i32, i32
  }
  func.func @transform_1(%arg0: i32, %arg1: i32) -> (i32, i32) {
    %c0_i32 = arith.constant 0 : i32
    %c0_i32_0 = arith.constant 0 : i32
    return %arg1, %c0_i32 : i32, i32
  }
  func.func @transform_2(%arg0: i32, %arg1: i32) -> (i32, i32) {
    %c0_i32 = arith.constant 0 : i32
    %c0_i32_0 = arith.constant 0 : i32
    %c0_i32_1 = arith.constant 0 : i32
    return %c0_i32, %c0_i32_0 : i32, i32
  }
  func.func @transform_3(%arg0: i32, %arg1: i32) -> (i32, i32) {
    %c0_i32 = arith.constant 0 : i32
    %c0_i32_0 = arith.constant 0 : i32
    return %arg0, %c0_i32 : i32, i32
  }
}

module attributes {stable_mosaic.version = 11 : i64} {
  func.func @_adj_matmul_kernel(%arg0: i32, %arg1: i32, %arg2: memref<128x128xi8, #tpu.memory_space<vmem>>, %arg3: memref<128x128xbf16, #tpu.memory_space<vmem>>, %arg4: memref<1x128xf32, #tpu.memory_space<vmem>>, %arg5: memref<128x128xf32, #tpu.memory_space<vmem>>, %arg6: memref<128x128xf32, #tpu.memory_space<vmem>>) attributes {dimension_semantics = [#tpu.dimension_semantics<parallel>, #tpu.dimension_semantics<arbitrary>], iteration_bounds = array<i64: 1, 1>, scalar_prefetch = 0 : i64, scratch_operands = 1 : i64, tpu.core_type = #tpu.core_type<tc>, window_params = [{transform_indices = @transform_0, window_bounds = array<i64: 128, 128>}, {transform_indices = @transform_1, window_bounds = array<i64: 128, 128>}, {pipeline_mode = #tpu.pipeline_mode<synchronous>, transform_indices = @transform_2, window_bounds = array<i64: 1, 128>}, {transform_indices = @transform_3, window_bounds = array<i64: 128, 128>}]} {
    %c0_i32 = arith.constant 0 : i32
    %0 = arith.cmpi eq, %arg1, %c0_i32 : i32
    %1 = arith.extui %0 : i1 to i32
    %c0_i32_0 = arith.constant 0 : i32
    %2 = arith.cmpi ne, %1, %c0_i32_0 : i32
    scf.if %2 {
      %cst_10 = arith.constant 0.000000e+00 : f32
      %13 = vector.broadcast %cst_10 : f32 to vector<128x128xf32>
      %c0_11 = arith.constant 0 : index
      %c0_12 = arith.constant 0 : index
      %14 = vector.load %arg6[%c0_11, %c0_12] : memref<128x128xf32, #tpu.memory_space<vmem>>, vector<128x128xf32>
      tpu.vector_store %arg6[%c0_11, %c0_12], %13 {strides = array<i32>} : memref<128x128xf32, #tpu.memory_space<vmem>>, vector<128x128xf32>,
    } else {
    }
    %c0 = arith.constant 0 : index
    %c0_1 = arith.constant 0 : index
    %3 = vector.load %arg2[%c0, %c0_1] : memref<128x128xi8, #tpu.memory_space<vmem>>, vector<128x128xi8>
    %4 = arith.sitofp %3 : vector<128x128xi8> to vector<128x128xbf16>
    %c0_2 = arith.constant 0 : index
    %c0_3 = arith.constant 0 : index
    %5 = vector.load %arg6[%c0_2, %c0_3] : memref<128x128xf32, #tpu.memory_space<vmem>>, vector<128x128xf32>
    %c0_4 = arith.constant 0 : index
    %c0_5 = arith.constant 0 : index
    %6 = vector.load %arg3[%c0_4, %c0_5] : memref<128x128xbf16, #tpu.memory_space<vmem>>, vector<128x128xbf16>
    %cst = arith.constant dense<0.000000e+00> : vector<128x128xf32>
    %7 = tpu.matmul %4, %6, %cst {dimension_numbers = #tpu.dot_dimension_numbers<[1], [0], [0], [1], [0, 0, 1, 1], [], []>} : vector<128x128xbf16>, vector<128x128xbf16>, vector<128x128xf32> -> vector<128x128xf32>
    %8 = arith.addf %5, %7 : vector<128x128xf32>
    %c0_6 = arith.constant 0 : index
    %c0_7 = arith.constant 0 : index
    %9 = vector.load %arg6[%c0_6, %c0_7] : memref<128x128xf32, #tpu.memory_space<vmem>>, vector<128x128xf32>
    tpu.vector_store %arg6[%c0_6, %c0_7], %8 {strides = array<i32>} : memref<128x128xf32, #tpu.memory_space<vmem>>, vector<128x128xf32>,
    %c0_i32_8 = arith.constant 0 : i32
    %10 = arith.cmpi eq, %arg1, %c0_i32_8 : i32
    %11 = arith.extui %10 : i1 to i32
    %c0_i32_9 = arith.constant 0 : i32
    %12 = arith.cmpi ne, %11, %c0_i32_9 : i32
    scf.if %12 {
      %c0_10 = arith.constant 0 : index
      %c0_11 = arith.constant 0 : index
      %13 = vector.load %arg6[%c0_10, %c0_11] : memref<128x128xf32, #tpu.memory_space<vmem>>, vector<128x128xf32>
      %c0_12 = arith.constant 0 : index
      %c0_13 = arith.constant 0 : index
      %14 = vector.load %arg4[%c0_12, %c0_13] : memref<1x128xf32, #tpu.memory_space<vmem>>, vector<1x128xf32>
      %15 = vector.broadcast %14 : vector<1x128xf32> to vector<128x128xf32>
      %16 = arith.addf %13, %15 : vector<128x128xf32>
      %c0_14 = arith.constant 0 : index
      %c0_15 = arith.constant 0 : index
      %17 = vector.load %arg5[%c0_14, %c0_15] : memref<128x128xf32, #tpu.memory_space<vmem>>, vector<128x128xf32>
      tpu.vector_store %arg5[%c0_14, %c0_15], %16 {strides = array<i32>} : memref<128x128xf32, #tpu.memory_space<vmem>>, vector<128x128xf32>,
    } else {
    }
    return
  }
  func.func @transform_0(%arg0: i32, %arg1: i32) -> (i32, i32) {
    %c0_i32 = arith.constant 0 : i32
    return %arg0, %arg1 : i32, i32
  }
  func.func @transform_1(%arg0: i32, %arg1: i32) -> (i32, i32) {
    %c0_i32 = arith.constant 0 : i32
    %c0_i32_0 = arith.constant 0 : i32
    return %arg1, %c0_i32 : i32, i32
  }
  func.func @transform_2(%arg0: i32, %arg1: i32) -> (i32, i32) {
    %c0_i32 = arith.constant 0 : i32
    %c0_i32_0 = arith.constant 0 : i32
    %c0_i32_1 = arith.constant 0 : i32
    return %c0_i32, %c0_i32_0 : i32, i32
  }
  func.func @transform_3(%arg0: i32, %arg1: i32) -> (i32, i32) {
    %c0_i32 = arith.constant 0 : i32
    %c0_i32_0 = arith.constant 0 : i32
    return %arg0, %c0_i32 : i32, i32
  }
}

</mosaic_0001>

<llo_original>
// kernel: _lambda_.5
$region0: #{_lambda_.5}
  #allocation0 [shape = 'u32[]', space=smem, size = 0x4, offset = 0x4, fixed_abs, tag = 'smem constant byte address 0x4 - core index']
  #allocation1 [shape = 'u32[72,128]{1,0:T(1,128)}', space=vmem, size = 0x9000, scoped, tag = 'internal scratch']
  #allocation2 [shape = 'f32[128,128]{1,0:T(8,128)}', space=vmem, size = 0x10000, scoped, tag = 'scratch operand']
  %s0 = inlined_call_operand.vmem [shape: s8[128,128], index: 0, kind: input, shape index: {}]
  %s1 = inlined_call_operand.vmem [shape: bf16[128,128], index: 1, kind: input, shape index: {}]
  %s2 = inlined_call_operand.vmem [shape: f32[1,128], index: 2, kind: input, shape index: {}]
  %s3 = inlined_call_operand.vmem [shape: f32[128,128], index: 3, kind: output, shape index: {}]
  %s4 = sld [smem:[#allocation0]]
  $region30: #{_lambda_.5} parent=0
    _
  %s6 = ssub.s32 1, %s4
  %s7 = scalar_select 0, %s6, %s4
  // Predicated region
  $region2: #{_lambda_.5} parent=0 // pred_check
    _
  $region3: #{_lambda_.5} parent=0 // pred_check_branch
    %9 = sbr.rel (0) target = $region5
  $region4: #{_lambda_.5} parent=0 // pred_region
    _
  $region5: #{_lambda_.5} parent=0 // pred_fallthru
    _
  // Predicated region
  $region6: #{_lambda_.5} parent=0 // pred_check
    _
  $region7: #{_lambda_.5} parent=0 // pred_check_branch
    %11 = sbr.rel (0) target = $region9
  $region8: #{_lambda_.5} parent=0 // pred_region
    _
  $region9: #{_lambda_.5} parent=0 // pred_fallthru
    _
  // Predicated region
  $region10: #{_lambda_.5} parent=0 // pred_check
    _
  $region11: #{_lambda_.5} parent=0 // pred_check_branch
    %13 = sbr.rel (0) target = $region13
  $region12: #{_lambda_.5} parent=0 // pred_region
    _
  $region13: #{_lambda_.5} parent=0 // pred_fallthru
    _
  %p14 = scmp.eq.s32.totalorder 0, 0
  // Predicated region
  $region14: #{_lambda_.5} parent=0 // pred_check
    %p15 = pneg %p14
  $region15: #{_lambda_.5} parent=0 // pred_check_branch
    %17 = sbr.rel (%p15) target = $region17
  $region16: #{_lambda_.5} parent=0 // pred_region
    %18 = vst [vmem:[#allocation2] sm:$0xff] 0.0
    %19 = vst [vmem:[#allocation2 + $0x8] sm:$0xff] 0.0
    %20 = vst [vmem:[#allocation2 + $0x10] sm:$0xff] 0.0
    %21 = vst [vmem:[#allocation2 + $0x18] sm:$0xff] 0.0
    %22 = vst [vmem:[#allocation2 + $0x20] sm:$0xff] 0.0
    %23 = vst [vmem:[#allocation2 + $0x28] sm:$0xff] 0.0
    %24 = vst [vmem:[#allocation2 + $0x30] sm:$0xff] 0.0
    %25 = vst [vmem:[#allocation2 + $0x38] sm:$0xff] 0.0
    %26 = vst [vmem:[#allocation2 + $0x40] sm:$0xff] 0.0
    %27 = vst [vmem:[#allocation2 + $0x48] sm:$0xff] 0.0
    %28 = vst [vmem:[#allocation2 + $0x50] sm:$0xff] 0.0
    %29 = vst [vmem:[#allocation2 + $0x58] sm:$0xff] 0.0
    %30 = vst [vmem:[#allocation2 + $0x60] sm:$0xff] 0.0
    %31 = vst [vmem:[#allocation2 + $0x68] sm:$0xff] 0.0
    %32 = vst [vmem:[#allocation2 + $0x70] sm:$0xff] 0.0
    %33 = vst [vmem:[#allocation2 + $0x78] sm:$0xff] 0.0
  $region17: #{_lambda_.5} parent=0 // pred_fallthru
    _
  %v34 = vld [vmem:[%s0] sm:$0xff]
  %v35 = vld [vmem:[%s0 + $0x8] sm:$0xff]
  %v36 = vld [vmem:[%s0 + $0x10] sm:$0xff]
  %v37 = vld [vmem:[%s0 + $0x18] sm:$0xff]
  %v38 = vunpack.c.0.s8 %v34
  %v39 = vunpack.c.1.s8 %v34
  %v40 = vunpack.c.2.s8 %v34
  %v41 = vunpack.c.3.s8 %v34
  %v42 = vunpack.c.0.s8 %v35
  %v43 = vunpack.c.1.s8 %v35
  %v44 = vunpack.c.2.s8 %v35
  %v45 = vunpack.c.3.s8 %v35
  %v46 = vunpack.c.0.s8 %v36
  %v47 = vunpack.c.1.s8 %v36
  %v48 = vunpack.c.2.s8 %v36
  %v49 = vunpack.c.3.s8 %v36
  %v50 = vunpack.c.0.s8 %v37
  %v51 = vunpack.c.1.s8 %v37
  %v52 = vunpack.c.2.s8 %v37
  %v53 = vunpack.c.3.s8 %v37
  %v54 = vcvt.s32.f32 %v38
  %v55 = vcvt.s32.f32 %v39
  %v56 = vcvt.s32.f32 %v40
  %v57 = vcvt.s32.f32 %v41
  %v58 = vcvt.s32.f32 %v42
  %v59 = vcvt.s32.f32 %v43
  %v60 = vcvt.s32.f32 %v44
  %v61 = vcvt.s32.f32 %v45
  %v62 = vcvt.s32.f32 %v46
  %v63 = vcvt.s32.f32 %v47
  %v64 = vcvt.s32.f32 %v48
  %v65 = vcvt.s32.f32 %v49
  %v66 = vcvt.s32.f32 %v50
  %v67 = vcvt.s32.f32 %v51
  %v68 = vcvt.s32.f32 %v52
  %v69 = vcvt.s32.f32 %v53
  %v70 = vpack.c.bf16 %v55, %v54
  %v71 = vpack.c.bf16 %v57, %v56
  %v72 = vpack.c.bf16 %v59, %v58
  %v73 = vpack.c.bf16 %v61, %v60
  %v74 = vpack.c.bf16 %v63, %v62
  %v75 = vpack.c.bf16 %v65, %v64
  %v76 = vpack.c.bf16 %v67, %v66
  %v77 = vpack.c.bf16 %v69, %v68
  %v78 = vld [vmem:[#allocation2] sm:$0xff]
  %v79 = vld [vmem:[#allocation2 + $0x8] sm:$0xff]
  %v80 = vld [vmem:[#allocation2 + $0x10] sm:$0xff]
  %v81 = vld [vmem:[#allocation2 + $0x18] sm:$0xff]
  %v82 = vld [vmem:[#allocation2 + $0x20] sm:$0xff]
  %v83 = vld [vmem:[#allocation2 + $0x28] sm:$0xff]
  %v84 = vld [vmem:[#allocation2 + $0x30] sm:$0xff]
  %v85 = vld [vmem:[#allocation2 + $0x38] sm:$0xff]
  %v86 = vld [vmem:[#allocation2 + $0x40] sm:$0xff]
  %v87 = vld [vmem:[#allocation2 + $0x48] sm:$0xff]
  %v88 = vld [vmem:[#allocation2 + $0x50] sm:$0xff]
  %v89 = vld [vmem:[#allocation2 + $0x58] sm:$0xff]
  %v90 = vld [vmem:[#allocation2 + $0x60] sm:$0xff]
  %v91 = vld [vmem:[#allocation2 + $0x68] sm:$0xff]
  %v92 = vld [vmem:[#allocation2 + $0x70] sm:$0xff]
  %v93 = vld [vmem:[#allocation2 + $0x78] sm:$0xff]
  %v94 = vld [vmem:[%s1] sm:$0xf]
  %v95 = vld [vmem:[%s1 + $0x4] sm:$0xf]
  %v96 = vld [vmem:[%s1 + $0x8] sm:$0xf]
  %v97 = vld [vmem:[%s1 + $0xc] sm:$0xf]
  %v98 = vld [vmem:[%s1 + $0x10] sm:$0xf]
  %v99 = vld [vmem:[%s1 + $0x14] sm:$0xf]
  %v100 = vld [vmem:[%s1 + $0x18] sm:$0xf]
  %v101 = vld [vmem:[%s1 + $0x1c] sm:$0xf]
  %v102 = vld [vmem:[%s1 + $0x20] sm:$0xf]
  %v103 = vld [vmem:[%s1 + $0x24] sm:$0xf]
  %v104 = vld [vmem:[%s1 + $0x28] sm:$0xf]
  %v105 = vld [vmem:[%s1 + $0x2c] sm:$0xf]
  %v106 = vld [vmem:[%s1 + $0x30] sm:$0xf]
  %v107 = vld [vmem:[%s1 + $0x34] sm:$0xf]
  %v108 = vld [vmem:[%s1 + $0x38] sm:$0xf]
  %v109 = vld [vmem:[%s1 + $0x3c] sm:$0xf]
  %v126 = vunpack.c.l.b16 %v94
  %v127 = vunpack.c.l.b16 %v95
  %v128 = vunpack.c.l.b16 %v96
  %v129 = vunpack.c.l.b16 %v97
  %v130 = vunpack.c.l.b16 %v98
  %v131 = vunpack.c.l.b16 %v99
  %v132 = vunpack.c.l.b16 %v100
  %v133 = vunpack.c.l.b16 %v101
  %v134 = vunpack.c.l.b16 %v102
  %v135 = vunpack.c.l.b16 %v103
  %v136 = vunpack.c.l.b16 %v104
  %v137 = vunpack.c.l.b16 %v105
  %v138 = vunpack.c.l.b16 %v106
  %v139 = vunpack.c.l.b16 %v107
  %v140 = vunpack.c.l.b16 %v108
  %v141 = vunpack.c.l.b16 %v109
  %v142 = vpack.c.b16 %v127, %v126
  %v143 = vpack.c.b16 %v129, %v128
  %v144 = vpack.c.b16 %v131, %v130
  %v145 = vpack.c.b16 %v133, %v132
  %v146 = vpack.c.b16 %v135, %v134
  %v147 = vpack.c.b16 %v137, %v136
  %v148 = vpack.c.b16 %v139, %v138
  %v149 = vpack.c.b16 %v141, %v140
  %158 = vmatpush.bf16.msra.mxu0 %v149
  %159 = vmatpush.bf16.msra.mxu0 %v148
  %160 = vmatpush.bf16.msra.mxu0 %v147
  %161 = vmatpush.bf16.msra.mxu0 %v146
  %162 = vmatpush.bf16.msra.mxu0 %v145
  %163 = vmatpush.bf16.msra.mxu0 %v144
  %164 = vmatpush.bf16.msra.mxu0 %v143
  %165 = vmatpush.bf16.msra.mxu0 %v142
  %166 = vmatmul.bf16.gmra.mxu0 %v70
  %v167 = vpop.f32.mrf.mxu0
  %v168 = vadd.f32 0.0, %v167
  %v169 = vpop.f32.mrf.mxu0
  %v170 = vadd.f32 0.0, %v169
  %171 = vmatmul.bf16.gmra.mxu0 %v71
  %v172 = vpop.f32.mrf.mxu0
  %v173 = vadd.f32 0.0, %v172
  %v174 = vpop.f32.mrf.mxu0
  %v175 = vadd.f32 0.0, %v174
  %176 = vmatmul.bf16.gmra.mxu0 %v72
  %v177 = vpop.f32.mrf.mxu0
  %v178 = vadd.f32 0.0, %v177
  %v179 = vpop.f32.mrf.mxu0
  %v180 = vadd.f32 0.0, %v179
  %181 = vmatmul.bf16.gmra.mxu0 %v73
  %v182 = vpop.f32.mrf.mxu0
  %v183 = vadd.f32 0.0, %v182
  %v184 = vpop.f32.mrf.mxu0
  %v185 = vadd.f32 0.0, %v184
  %186 = vmatmul.bf16.gmra.mxu0 %v74
  %v187 = vpop.f32.mrf.mxu0
  %v188 = vadd.f32 0.0, %v187
  %v189 = vpop.f32.mrf.mxu0
  %v190 = vadd.f32 0.0, %v189
  %191 = vmatmul.bf16.gmra.mxu0 %v75
  %v192 = vpop.f32.mrf.mxu0
  %v193 = vadd.f32 0.0, %v192
  %v194 = vpop.f32.mrf.mxu0
  %v195 = vadd.f32 0.0, %v194
  %196 = vmatmul.bf16.gmra.mxu0 %v76
  %v197 = vpop.f32.mrf.mxu0
  %v198 = vadd.f32 0.0, %v197
  %v199 = vpop.f32.mrf.mxu0
  %v200 = vadd.f32 0.0, %v199
  %201 = vmatmul.bf16.gmra.mxu0 %v77
  %v202 = vpop.f32.mrf.mxu0
  %v203 = vadd.f32 0.0, %v202
  %v204 = vpop.f32.mrf.mxu0
  %v205 = vadd.f32 0.0, %v204
  %206 = vdwg.mxu0
  %v207 = vadd.f32 %v78, %v168
  %v208 = vadd.f32 %v79, %v170
  %v209 = vadd.f32 %v80, %v173
  %v210 = vadd.f32 %v81, %v175
  %v211 = vadd.f32 %v82, %v178
  %v212 = vadd.f32 %v83, %v180
  %v213 = vadd.f32 %v84, %v183
  %v214 = vadd.f32 %v85, %v185
  %v215 = vadd.f32 %v86, %v188
  %v216 = vadd.f32 %v87, %v190
  %v217 = vadd.f32 %v88, %v193
  %v218 = vadd.f32 %v89, %v195
  %v219 = vadd.f32 %v90, %v198
  %v220 = vadd.f32 %v91, %v200
  %v221 = vadd.f32 %v92, %v203
  %v222 = vadd.f32 %v93, %v205
  %223 = vst [vmem:[#allocation2] sm:$0xff] %v207
  %224 = vst [vmem:[#allocation2 + $0x8] sm:$0xff] %v208
  %225 = vst [vmem:[#allocation2 + $0x10] sm:$0xff] %v209
  %226 = vst [vmem:[#allocation2 + $0x18] sm:$0xff] %v210
  %227 = vst [vmem:[#allocation2 + $0x20] sm:$0xff] %v211
  %228 = vst [vmem:[#allocation2 + $0x28] sm:$0xff] %v212
  %229 = vst [vmem:[#allocation2 + $0x30] sm:$0xff] %v213
  %230 = vst [vmem:[#allocation2 + $0x38] sm:$0xff] %v214
  %231 = vst [vmem:[#allocation2 + $0x40] sm:$0xff] %v215
  %232 = vst [vmem:[#allocation2 + $0x48] sm:$0xff] %v216
  %233 = vst [vmem:[#allocation2 + $0x50] sm:$0xff] %v217
  %234 = vst [vmem:[#allocation2 + $0x58] sm:$0xff] %v218
  %235 = vst [vmem:[#allocation2 + $0x60] sm:$0xff] %v219
  %236 = vst [vmem:[#allocation2 + $0x68] sm:$0xff] %v220
  %237 = vst [vmem:[#allocation2 + $0x70] sm:$0xff] %v221
  %238 = vst [vmem:[#allocation2 + $0x78] sm:$0xff] %v222
  // Predicated region
  $region18: #{_lambda_.5} parent=0 // pred_check
    %p239 = pneg %p14
  $region19: #{_lambda_.5} parent=0 // pred_check_branch
    %241 = sbr.rel (%p239) target = $region21
  $region20: #{_lambda_.5} parent=0 // pred_region
    %v242 = vld [vmem:[#allocation2] sm:$0xff]
    %v243 = vld [vmem:[#allocation2 + $0x8] sm:$0xff]
    %v244 = vld [vmem:[#allocation2 + $0x10] sm:$0xff]
    %v245 = vld [vmem:[#allocation2 + $0x18] sm:$0xff]
    %v246 = vld [vmem:[#allocation2 + $0x20] sm:$0xff]
    %v247 = vld [vmem:[#allocation2 + $0x28] sm:$0xff]
    %v248 = vld [vmem:[#allocation2 + $0x30] sm:$0xff]
    %v249 = vld [vmem:[#allocation2 + $0x38] sm:$0xff]
    %v250 = vld [vmem:[#allocation2 + $0x40] sm:$0xff]
    %v251 = vld [vmem:[#allocation2 + $0x48] sm:$0xff]
    %v252 = vld [vmem:[#allocation2 + $0x50] sm:$0xff]
    %v253 = vld [vmem:[#allocation2 + $0x58] sm:$0xff]
    %v254 = vld [vmem:[#allocation2 + $0x60] sm:$0xff]
    %v255 = vld [vmem:[#allocation2 + $0x68] sm:$0xff]
    %v256 = vld [vmem:[#allocation2 + $0x70] sm:$0xff]
    %v257 = vld [vmem:[#allocation2 + $0x78] sm:$0xff]
    %v258 = vld [vmem:[%s2] sm:$0x1]
    %v260 = vperm.slane %v258, 0
    %v262 = vadd.f32 %v242, %v260
    %v263 = vadd.f32 %v243, %v260
    %v264 = vadd.f32 %v244, %v260
    %v265 = vadd.f32 %v245, %v260
    %v266 = vadd.f32 %v246, %v260
    %v267 = vadd.f32 %v247, %v260
    %v268 = vadd.f32 %v248, %v260
    %v269 = vadd.f32 %v249, %v260
    %v270 = vadd.f32 %v250, %v260
    %v271 = vadd.f32 %v251, %v260
    %v272 = vadd.f32 %v252, %v260
    %v273 = vadd.f32 %v253, %v260
    %v274 = vadd.f32 %v254, %v260
    %v275 = vadd.f32 %v255, %v260
    %v276 = vadd.f32 %v256, %v260
    %v277 = vadd.f32 %v257, %v260
    %278 = vst [vmem:[%s3] sm:$0xff] %v262
    %279 = vst [vmem:[%s3 + $0x8] sm:$0xff] %v263
    %280 = vst [vmem:[%s3 + $0x10] sm:$0xff] %v264
    %281 = vst [vmem:[%s3 + $0x18] sm:$0xff] %v265
    %282 = vst [vmem:[%s3 + $0x20] sm:$0xff] %v266
    %283 = vst [vmem:[%s3 + $0x28] sm:$0xff] %v267
    %284 = vst [vmem:[%s3 + $0x30] sm:$0xff] %v268
    %285 = vst [vmem:[%s3 + $0x38] sm:$0xff] %v269
    %286 = vst [vmem:[%s3 + $0x40] sm:$0xff] %v270
    %287 = vst [vmem:[%s3 + $0x48] sm:$0xff] %v271
    %288 = vst [vmem:[%s3 + $0x50] sm:$0xff] %v272
    %289 = vst [vmem:[%s3 + $0x58] sm:$0xff] %v273
    %290 = vst [vmem:[%s3 + $0x60] sm:$0xff] %v274
    %291 = vst [vmem:[%s3 + $0x68] sm:$0xff] %v275
    %292 = vst [vmem:[%s3 + $0x70] sm:$0xff] %v276
    %293 = vst [vmem:[%s3 + $0x78] sm:$0xff] %v277
  $region21: #{_lambda_.5} parent=0 // pred_fallthru
    _
  // Predicated region
  $region22: #{_lambda_.5} parent=0 // pred_check
    _
  $region23: #{_lambda_.5} parent=0 // pred_check_branch
    %295 = sbr.rel (0) target = $region25
  $region24: #{_lambda_.5} parent=0 // pred_region
    _
  $region25: #{_lambda_.5} parent=0 // pred_fallthru
    _
  // Predicated region
  $region26: #{_lambda_.5} parent=0 // pred_check
    _
  $region27: #{_lambda_.5} parent=0 // pred_check_branch
    %297 = sbr.rel (0) target = $region29
  $region28: #{_lambda_.5} parent=0 // pred_region
    _
  $region29: #{_lambda_.5} parent=0 // pred_fallthru
    _

// kernel: _lambda_.3
$region0: #{_lambda_.3}
  #allocation0 [shape = 'u32[]', space=smem, size = 0x4, offset = 0x4, fixed_abs, tag = 'smem constant byte address 0x4 - core index']
  #allocation1 [shape = 'u32[72,128]{1,0:T(1,128)}', space=vmem, size = 0x9000, scoped, tag = 'internal scratch']
  #allocation2 [shape = 'f32[128,128]{1,0:T(8,128)}', space=vmem, size = 0x10000, scoped, tag = 'scratch operand']
  %s0 = inlined_call_operand.vmem [shape: s8[128,128], index: 0, kind: input, shape index: {}]
  %s1 = inlined_call_operand.vmem [shape: bf16[128,128], index: 1, kind: input, shape index: {}]
  %s2 = inlined_call_operand.vmem [shape: f32[1,128], index: 2, kind: input, shape index: {}]
  %s3 = inlined_call_operand.vmem [shape: bf16[128,128], index: 3, kind: output, shape index: {}]
  %s4 = sld [smem:[#allocation0]]
  $region30: #{_lambda_.3} parent=0
    _
  %s6 = ssub.s32 1, %s4
  %s7 = scalar_select 0, %s6, %s4
  // Predicated region
  $region2: #{_lambda_.3} parent=0 // pred_check
    _
  $region3: #{_lambda_.3} parent=0 // pred_check_branch
    %9 = sbr.rel (0) target = $region5
  $region4: #{_lambda_.3} parent=0 // pred_region
    _
  $region5: #{_lambda_.3} parent=0 // pred_fallthru
    _
  // Predicated region
  $region6: #{_lambda_.3} parent=0 // pred_check
    _
  $region7: #{_lambda_.3} parent=0 // pred_check_branch
    %11 = sbr.rel (0) target = $region9
  $region8: #{_lambda_.3} parent=0 // pred_region
    _
  $region9: #{_lambda_.3} parent=0 // pred_fallthru
    _
  // Predicated region
  $region10: #{_lambda_.3} parent=0 // pred_check
    _
  $region11: #{_lambda_.3} parent=0 // pred_check_branch
    %13 = sbr.rel (0) target = $region13
  $region12: #{_lambda_.3} parent=0 // pred_region
    _
  $region13: #{_lambda_.3} parent=0 // pred_fallthru
    _
  %p14 = scmp.eq.s32.totalorder 0, 0
  // Predicated region
  $region14: #{_lambda_.3} parent=0 // pred_check
    %p15 = pneg %p14
  $region15: #{_lambda_.3} parent=0 // pred_check_branch
    %17 = sbr.rel (%p15) target = $region17
  $region16: #{_lambda_.3} parent=0 // pred_region
    %18 = vst [vmem:[#allocation2] sm:$0xff] 0.0
    %19 = vst [vmem:[#allocation2 + $0x8] sm:$0xff] 0.0
    %20 = vst [vmem:[#allocation2 + $0x10] sm:$0xff] 0.0
    %21 = vst [vmem:[#allocation2 + $0x18] sm:$0xff] 0.0
    %22 = vst [vmem:[#allocation2 + $0x20] sm:$0xff] 0.0
    %23 = vst [vmem:[#allocation2 + $0x28] sm:$0xff] 0.0
    %24 = vst [vmem:[#allocation2 + $0x30] sm:$0xff] 0.0
    %25 = vst [vmem:[#allocation2 + $0x38] sm:$0xff] 0.0
    %26 = vst [vmem:[#allocation2 + $0x40] sm:$0xff] 0.0
    %27 = vst [vmem:[#allocation2 + $0x48] sm:$0xff] 0.0
    %28 = vst [vmem:[#allocation2 + $0x50] sm:$0xff] 0.0
    %29 = vst [vmem:[#allocation2 + $0x58] sm:$0xff] 0.0
    %30 = vst [vmem:[#allocation2 + $0x60] sm:$0xff] 0.0
    %31 = vst [vmem:[#allocation2 + $0x68] sm:$0xff] 0.0
    %32 = vst [vmem:[#allocation2 + $0x70] sm:$0xff] 0.0
    %33 = vst [vmem:[#allocation2 + $0x78] sm:$0xff] 0.0
  $region17: #{_lambda_.3} parent=0 // pred_fallthru
    _
  %v34 = vld [vmem:[%s0] sm:$0xff]
  %v35 = vld [vmem:[%s0 + $0x8] sm:$0xff]
  %v36 = vld [vmem:[%s0 + $0x10] sm:$0xff]
  %v37 = vld [vmem:[%s0 + $0x18] sm:$0xff]
  %v38 = vunpack.c.0.s8 %v34
  %v39 = vunpack.c.1.s8 %v34
  %v40 = vunpack.c.2.s8 %v34
  %v41 = vunpack.c.3.s8 %v34
  %v42 = vunpack.c.0.s8 %v35
  %v43 = vunpack.c.1.s8 %v35
  %v44 = vunpack.c.2.s8 %v35
  %v45 = vunpack.c.3.s8 %v35
  %v46 = vunpack.c.0.s8 %v36
  %v47 = vunpack.c.1.s8 %v36
  %v48 = vunpack.c.2.s8 %v36
  %v49 = vunpack.c.3.s8 %v36
  %v50 = vunpack.c.0.s8 %v37
  %v51 = vunpack.c.1.s8 %v37
  %v52 = vunpack.c.2.s8 %v37
  %v53 = vunpack.c.3.s8 %v37
  %v54 = vcvt.s32.f32 %v38
  %v55 = vcvt.s32.f32 %v39
  %v56 = vcvt.s32.f32 %v40
  %v57 = vcvt.s32.f32 %v41
  %v58 = vcvt.s32.f32 %v42
  %v59 = vcvt.s32.f32 %v43
  %v60 = vcvt.s32.f32 %v44
  %v61 = vcvt.s32.f32 %v45
  %v62 = vcvt.s32.f32 %v46
  %v63 = vcvt.s32.f32 %v47
  %v64 = vcvt.s32.f32 %v48
  %v65 = vcvt.s32.f32 %v49
  %v66 = vcvt.s32.f32 %v50
  %v67 = vcvt.s32.f32 %v51
  %v68 = vcvt.s32.f32 %v52
  %v69 = vcvt.s32.f32 %v53
  %v70 = vpack.c.bf16 %v55, %v54
  %v71 = vpack.c.bf16 %v57, %v56
  %v72 = vpack.c.bf16 %v59, %v58
  %v73 = vpack.c.bf16 %v61, %v60
  %v74 = vpack.c.bf16 %v63, %v62
  %v75 = vpack.c.bf16 %v65, %v64
  %v76 = vpack.c.bf16 %v67, %v66
  %v77 = vpack.c.bf16 %v69, %v68
  %v78 = vld [vmem:[#allocation2] sm:$0xff]
  %v79 = vld [vmem:[#allocation2 + $0x8] sm:$0xff]
  %v80 = vld [vmem:[#allocation2 + $0x10] sm:$0xff]
  %v81 = vld [vmem:[#allocation2 + $0x18] sm:$0xff]
  %v82 = vld [vmem:[#allocation2 + $0x20] sm:$0xff]
  %v83 = vld [vmem:[#allocation2 + $0x28] sm:$0xff]
  %v84 = vld [vmem:[#allocation2 + $0x30] sm:$0xff]
  %v85 = vld [vmem:[#allocation2 + $0x38] sm:$0xff]
  %v86 = vld [vmem:[#allocation2 + $0x40] sm:$0xff]
  %v87 = vld [vmem:[#allocation2 + $0x48] sm:$0xff]
  %v88 = vld [vmem:[#allocation2 + $0x50] sm:$0xff]
  %v89 = vld [vmem:[#allocation2 + $0x58] sm:$0xff]
  %v90 = vld [vmem:[#allocation2 + $0x60] sm:$0xff]
  %v91 = vld [vmem:[#allocation2 + $0x68] sm:$0xff]
  %v92 = vld [vmem:[#allocation2 + $0x70] sm:$0xff]
  %v93 = vld [vmem:[#allocation2 + $0x78] sm:$0xff]
  %v94 = vld [vmem:[%s1] sm:$0xf]
  %v95 = vld [vmem:[%s1 + $0x4] sm:$0xf]
  %v96 = vld [vmem:[%s1 + $0x8] sm:$0xf]
  %v97 = vld [vmem:[%s1 + $0xc] sm:$0xf]
  %v98 = vld [vmem:[%s1 + $0x10] sm:$0xf]
  %v99 = vld [vmem:[%s1 + $0x14] sm:$0xf]
  %v100 = vld [vmem:[%s1 + $0x18] sm:$0xf]
  %v101 = vld [vmem:[%s1 + $0x1c] sm:$0xf]
  %v102 = vld [vmem:[%s1 + $0x20] sm:$0xf]
  %v103 = vld [vmem:[%s1 + $0x24] sm:$0xf]
  %v104 = vld [vmem:[%s1 + $0x28] sm:$0xf]
  %v105 = vld [vmem:[%s1 + $0x2c] sm:$0xf]
  %v106 = vld [vmem:[%s1 + $0x30] sm:$0xf]
  %v107 = vld [vmem:[%s1 + $0x34] sm:$0xf]
  %v108 = vld [vmem:[%s1 + $0x38] sm:$0xf]
  %v109 = vld [vmem:[%s1 + $0x3c] sm:$0xf]
  %v126 = vunpack.c.l.b16 %v94
  %v127 = vunpack.c.l.b16 %v95
  %v128 = vunpack.c.l.b16 %v96
  %v129 = vunpack.c.l.b16 %v97
  %v130 = vunpack.c.l.b16 %v98
  %v131 = vunpack.c.l.b16 %v99
  %v132 = vunpack.c.l.b16 %v100
  %v133 = vunpack.c.l.b16 %v101
  %v134 = vunpack.c.l.b16 %v102
  %v135 = vunpack.c.l.b16 %v103
  %v136 = vunpack.c.l.b16 %v104
  %v137 = vunpack.c.l.b16 %v105
  %v138 = vunpack.c.l.b16 %v106
  %v139 = vunpack.c.l.b16 %v107
  %v140 = vunpack.c.l.b16 %v108
  %v141 = vunpack.c.l.b16 %v109
  %v142 = vpack.c.b16 %v127, %v126
  %v143 = vpack.c.b16 %v129, %v128
  %v144 = vpack.c.b16 %v131, %v130
  %v145 = vpack.c.b16 %v133, %v132
  %v146 = vpack.c.b16 %v135, %v134
  %v147 = vpack.c.b16 %v137, %v136
  %v148 = vpack.c.b16 %v139, %v138
  %v149 = vpack.c.b16 %v141, %v140
  %158 = vmatpush.bf16.msra.mxu0 %v149
  %159 = vmatpush.bf16.msra.mxu0 %v148
  %160 = vmatpush.bf16.msra.mxu0 %v147
  %161 = vmatpush.bf16.msra.mxu0 %v146
  %162 = vmatpush.bf16.msra.mxu0 %v145
  %163 = vmatpush.bf16.msra.mxu0 %v144
  %164 = vmatpush.bf16.msra.mxu0 %v143
  %165 = vmatpush.bf16.msra.mxu0 %v142
  %166 = vmatmul.bf16.gmra.mxu0 %v70
  %v167 = vpop.f32.mrf.mxu0
  %v168 = vadd.f32 0.0, %v167
  %v169 = vpop.f32.mrf.mxu0
  %v170 = vadd.f32 0.0, %v169
  %171 = vmatmul.bf16.gmra.mxu0 %v71
  %v172 = vpop.f32.mrf.mxu0
  %v173 = vadd.f32 0.0, %v172
  %v174 = vpop.f32.mrf.mxu0
  %v175 = vadd.f32 0.0, %v174
  %176 = vmatmul.bf16.gmra.mxu0 %v72
  %v177 = vpop.f32.mrf.mxu0
  %v178 = vadd.f32 0.0, %v177
  %v179 = vpop.f32.mrf.mxu0
  %v180 = vadd.f32 0.0, %v179
  %181 = vmatmul.bf16.gmra.mxu0 %v73
  %v182 = vpop.f32.mrf.mxu0
  %v183 = vadd.f32 0.0, %v182
  %v184 = vpop.f32.mrf.mxu0
  %v185 = vadd.f32 0.0, %v184
  %186 = vmatmul.bf16.gmra.mxu0 %v74
  %v187 = vpop.f32.mrf.mxu0
  %v188 = vadd.f32 0.0, %v187
  %v189 = vpop.f32.mrf.mxu0
  %v190 = vadd.f32 0.0, %v189
  %191 = vmatmul.bf16.gmra.mxu0 %v75
  %v192 = vpop.f32.mrf.mxu0
  %v193 = vadd.f32 0.0, %v192
  %v194 = vpop.f32.mrf.mxu0
  %v195 = vadd.f32 0.0, %v194
  %196 = vmatmul.bf16.gmra.mxu0 %v76
  %v197 = vpop.f32.mrf.mxu0
  %v198 = vadd.f32 0.0, %v197
  %v199 = vpop.f32.mrf.mxu0
  %v200 = vadd.f32 0.0, %v199
  %201 = vmatmul.bf16.gmra.mxu0 %v77
  %v202 = vpop.f32.mrf.mxu0
  %v203 = vadd.f32 0.0, %v202
  %v204 = vpop.f32.mrf.mxu0
  %v205 = vadd.f32 0.0, %v204
  %206 = vdwg.mxu0
  %v207 = vadd.f32 %v78, %v168
  %v208 = vadd.f32 %v79, %v170
  %v209 = vadd.f32 %v80, %v173
  %v210 = vadd.f32 %v81, %v175
  %v211 = vadd.f32 %v82, %v178
  %v212 = vadd.f32 %v83, %v180
  %v213 = vadd.f32 %v84, %v183
  %v214 = vadd.f32 %v85, %v185
  %v215 = vadd.f32 %v86, %v188
  %v216 = vadd.f32 %v87, %v190
  %v217 = vadd.f32 %v88, %v193
  %v218 = vadd.f32 %v89, %v195
  %v219 = vadd.f32 %v90, %v198
  %v220 = vadd.f32 %v91, %v200
  %v221 = vadd.f32 %v92, %v203
  %v222 = vadd.f32 %v93, %v205
  %223 = vst [vmem:[#allocation2] sm:$0xff] %v207
  %224 = vst [vmem:[#allocation2 + $0x8] sm:$0xff] %v208
  %225 = vst [vmem:[#allocation2 + $0x10] sm:$0xff] %v209
  %226 = vst [vmem:[#allocation2 + $0x18] sm:$0xff] %v210
  %227 = vst [vmem:[#allocation2 + $0x20] sm:$0xff] %v211
  %228 = vst [vmem:[#allocation2 + $0x28] sm:$0xff] %v212
  %229 = vst [vmem:[#allocation2 + $0x30] sm:$0xff] %v213
  %230 = vst [vmem:[#allocation2 + $0x38] sm:$0xff] %v214
  %231 = vst [vmem:[#allocation2 + $0x40] sm:$0xff] %v215
  %232 = vst [vmem:[#allocation2 + $0x48] sm:$0xff] %v216
  %233 = vst [vmem:[#allocation2 + $0x50] sm:$0xff] %v217
  %234 = vst [vmem:[#allocation2 + $0x58] sm:$0xff] %v218
  %235 = vst [vmem:[#allocation2 + $0x60] sm:$0xff] %v219
  %236 = vst [vmem:[#allocation2 + $0x68] sm:$0xff] %v220
  %237 = vst [vmem:[#allocation2 + $0x70] sm:$0xff] %v221
  %238 = vst [vmem:[#allocation2 + $0x78] sm:$0xff] %v222
  // Predicated region
  $region18: #{_lambda_.3} parent=0 // pred_check
    %p239 = pneg %p14
  $region19: #{_lambda_.3} parent=0 // pred_check_branch
    %241 = sbr.rel (%p239) target = $region21
  $region20: #{_lambda_.3} parent=0 // pred_region
    %v242 = vld [vmem:[#allocation2] sm:$0xff]
    %v243 = vld [vmem:[#allocation2 + $0x8] sm:$0xff]
    %v244 = vld [vmem:[#allocation2 + $0x10] sm:$0xff]
    %v245 = vld [vmem:[#allocation2 + $0x18] sm:$0xff]
    %v246 = vld [vmem:[#allocation2 + $0x20] sm:$0xff]
    %v247 = vld [vmem:[#allocation2 + $0x28] sm:$0xff]
    %v248 = vld [vmem:[#allocation2 + $0x30] sm:$0xff]
    %v249 = vld [vmem:[#allocation2 + $0x38] sm:$0xff]
    %v250 = vld [vmem:[#allocation2 + $0x40] sm:$0xff]
    %v251 = vld [vmem:[#allocation2 + $0x48] sm:$0xff]
    %v252 = vld [vmem:[#allocation2 + $0x50] sm:$0xff]
    %v253 = vld [vmem:[#allocation2 + $0x58] sm:$0xff]
    %v254 = vld [vmem:[#allocation2 + $0x60] sm:$0xff]
    %v255 = vld [vmem:[#allocation2 + $0x68] sm:$0xff]
    %v256 = vld [vmem:[#allocation2 + $0x70] sm:$0xff]
    %v257 = vld [vmem:[#allocation2 + $0x78] sm:$0xff]
    %v258 = vld [vmem:[%s2] sm:$0x1]
    %v260 = vperm.slane %v258, 0
    %v262 = vadd.f32 %v242, %v260
    %v263 = vadd.f32 %v243, %v260
    %v264 = vadd.f32 %v244, %v260
    %v265 = vadd.f32 %v245, %v260
    %v266 = vadd.f32 %v246, %v260
    %v267 = vadd.f32 %v247, %v260
    %v268 = vadd.f32 %v248, %v260
    %v269 = vadd.f32 %v249, %v260
    %v270 = vadd.f32 %v250, %v260
    %v271 = vadd.f32 %v251, %v260
    %v272 = vadd.f32 %v252, %v260
    %v273 = vadd.f32 %v253, %v260
    %v274 = vadd.f32 %v254, %v260
    %v275 = vadd.f32 %v255, %v260
    %v276 = vadd.f32 %v256, %v260
    %v277 = vadd.f32 %v257, %v260
    %v278 = vmax.f32 %v262, 0.0
    %v279 = vmax.f32 %v263, 0.0
    %v280 = vmax.f32 %v264, 0.0
    %v281 = vmax.f32 %v265, 0.0
    %v282 = vmax.f32 %v266, 0.0
    %v283 = vmax.f32 %v267, 0.0
    %v284 = vmax.f32 %v268, 0.0
    %v285 = vmax.f32 %v269, 0.0
    %v286 = vmax.f32 %v270, 0.0
    %v287 = vmax.f32 %v271, 0.0
    %v288 = vmax.f32 %v272, 0.0
    %v289 = vmax.f32 %v273, 0.0
    %v290 = vmax.f32 %v274, 0.0
    %v291 = vmax.f32 %v275, 0.0
    %v292 = vmax.f32 %v276, 0.0
    %v293 = vmax.f32 %v277, 0.0
    %v294 = vpack.c.bf16 %v278, %v278
    %v295 = vpack.c.bf16 %v279, %v279
    %v296 = vpack.c.bf16 %v280, %v280
    %v297 = vpack.c.bf16 %v281, %v281
    %v298 = vpack.c.bf16 %v282, %v282
    %v299 = vpack.c.bf16 %v283, %v283
    %v300 = vpack.c.bf16 %v284, %v284
    %v301 = vpack.c.bf16 %v285, %v285
    %v302 = vpack.c.bf16 %v286, %v286
    %v303 = vpack.c.bf16 %v287, %v287
    %v304 = vpack.c.bf16 %v288, %v288
    %v305 = vpack.c.bf16 %v289, %v289
    %v306 = vpack.c.bf16 %v290, %v290
    %v307 = vpack.c.bf16 %v291, %v291
    %v308 = vpack.c.bf16 %v292, %v292
    %v309 = vpack.c.bf16 %v293, %v293
    %310 = vst [vmem:[%s3] sm:$0xf] %v294
    %311 = vst [vmem:[%s3 + $0x4] sm:$0xf] %v295
    %312 = vst [vmem:[%s3 + $0x8] sm:$0xf] %v296
    %313 = vst [vmem:[%s3 + $0xc] sm:$0xf] %v297
    %314 = vst [vmem:[%s3 + $0x10] sm:$0xf] %v298
    %315 = vst [vmem:[%s3 + $0x14] sm:$0xf] %v299
    %316 = vst [vmem:[%s3 + $0x18] sm:$0xf] %v300
    %317 = vst [vmem:[%s3 + $0x1c] sm:$0xf] %v301
    %318 = vst [vmem:[%s3 + $0x20] sm:$0xf] %v302
    %319 = vst [vmem:[%s3 + $0x24] sm:$0xf] %v303
    %320 = vst [vmem:[%s3 + $0x28] sm:$0xf] %v304
    %321 = vst [vmem:[%s3 + $0x2c] sm:$0xf] %v305
    %322 = vst [vmem:[%s3 + $0x30] sm:$0xf] %v306
    %323 = vst [vmem:[%s3 + $0x34] sm:$0xf] %v307
    %324 = vst [vmem:[%s3 + $0x38] sm:$0xf] %v308
    %325 = vst [vmem:[%s3 + $0x3c] sm:$0xf] %v309
  $region21: #{_lambda_.3} parent=0 // pred_fallthru
    _
  // Predicated region
  $region22: #{_lambda_.3} parent=0 // pred_check
    _
  $region23: #{_lambda_.3} parent=0 // pred_check_branch
    %327 = sbr.rel (0) target = $region25
  $region24: #{_lambda_.3} parent=0 // pred_region
    _
  $region25: #{_lambda_.3} parent=0 // pred_fallthru
    _
  // Predicated region
  $region26: #{_lambda_.3} parent=0 // pred_check
    _
  $region27: #{_lambda_.3} parent=0 // pred_check_branch
    %329 = sbr.rel (0) target = $region29
  $region28: #{_lambda_.3} parent=0 // pred_region
    _
  $region29: #{_lambda_.3} parent=0 // pred_fallthru
    _

</llo_original>
